<compile_context>
chip_gen: v7x
topology: tpu7x:2x2x1
jax: 0.10.0
libtpu: 0.0.40
codegen_flags: <defaults>
</compile_context>

<pallas_src>
import jax
import jax.numpy as jnp
from jax.experimental import pallas as pl
from jax.experimental.pallas import tpu as pltpu


def attention_gate_kernel(g_ref, x_ref, wg_ref, wx_ref, b_ref, wp_ref, bp_ref,
                          o_ref):
    """Fused attention gate for one (batch, pixel-tile) block.

    g_ref : (F_g, T)      gating-signal pixels (channels on sublanes, pixels on lanes)
    x_ref : (F_l, T)      skip-connection pixels
    wg_ref: (F_int, F_g)  W_g 1x1 conv weights, BN folded, (Cout, Cin) layout
    wx_ref: (F_int, F_l)  W_x 1x1 conv weights, BN folded
    b_ref : (F_int, 1)    combined bias (bg + bx), BN folded
    wp_ref: (F_int, 1)    psi 1x1 conv weights (BN folded), as a column
    bp_ref: (1, 1)        psi bias (BN folded)
    o_ref : (F_l, T)      gated output x * psi
    """
    g = g_ref[...]          # keep input dtype: bf16 inputs hit the MXU directly
    x = x_ref[...]

    # 1x1 conv (+ folded BN) == matmul; f32 accumulation on the MXU.
    g1 = jnp.dot(wg_ref[...], g, preferred_element_type=jnp.float32)
    x1 = jnp.dot(wx_ref[...], x, preferred_element_type=jnp.float32)

    # relu(g1 + x1 + bias)  -- VPU
    a = jnp.maximum(g1 + x1 + b_ref[...], 0.0)             # (F_int, T), f32

    # psi: width-1 conv done as VPU multiply + cross-sublane (XLU) reduction
    # instead of a 1-wide MXU matmul; sigmoid on the EUP, all in f32.
    psi = jnp.sum(a * wp_ref[...], axis=0, keepdims=True) + bp_ref[...]
    psi = jax.nn.sigmoid(psi)                               # (1, T)

    # gate the skip connection (psi broadcast across channels / sublanes)
    o_ref[...] = (x * psi).astype(o_ref.dtype)


def fold_bn(w, b, gamma, beta, mean, var, eps=1e-5):
    """Fold eval-mode BatchNorm into a 1x1 conv expressed as (Cin, Cout) matmul."""
    scale = gamma / jnp.sqrt(var + eps)          # (Cout,)
    w_f = w * scale[None, :]                     # (Cin, Cout)
    b_f = (b - mean) * scale + beta              # (Cout,)
    return w_f, b_f


def _pick_tile(hw, F_g, F_l, F_int, itemsize, max_tile=4096,
               vmem_budget=24 * 1024 * 1024):
    """Pixel tile (lane axis): biggest multiple of 128 dividing HW that fits budget."""
    if hw % 128 != 0:
        # Full-extent block is always layout-legal (equals the array dim).
        # TODO(synk): ragged spatial tiling for huge non-128-multiple HW.
        return hw
    # Bytes per lane-column: double-buffered g/x/out streams plus f32
    # intermediates (g1, x1, a, psi) produced inside the body.
    per_lane = 2 * itemsize * (F_g + 2 * F_l) + 4 * (3 * F_int + 2)
    t = int(vmem_budget // max(per_lane, 1))
    t = min(t, hw, max_tile)
    t -= t % 128
    t = max(t, 128)
    while hw % t != 0:
        t -= 128
    return t


def attention_block(g, x, params, *, tile=None, interpret=False):
    """g, x: NCHW arrays. Returns x * psi in NCHW (use_cam_pam=False path)."""
    N, F_g, H, W = g.shape
    Nx, F_l, Hx, Wx = x.shape
    assert (N, H, W) == (Nx, Hx, Wx), "pad_to_cat no-op case only (same spatial dims)"
    HW = H * W

    # Fold BN into the 1x1 convs; pre-combine the W_g/W_x biases (exact).
    wg, bg = fold_bn(params["wg"], params["bg"], *params["bn_g"])
    wx, bx = fold_bn(params["wx"], params["bx"], *params["bn_x"])
    wp, bp = fold_bn(params["wp"], params["bp"], *params["bn_p"])
    F_int = wg.shape[1]

    cdt = x.dtype                                   # matmul operand dtype (bf16 stays bf16)
    wg_t = jnp.asarray(wg.T, dtype=cdt)             # (F_int, F_g)
    wx_t = jnp.asarray(wx.T, dtype=cdt)             # (F_int, F_l)
    b_gx = (bg + bx).reshape(F_int, 1).astype(jnp.float32)
    wp_col = wp.reshape(F_int, 1).astype(jnp.float32)
    bp_s = bp.reshape(1, 1).astype(jnp.float32)

    # NCHW -> (N, C, H*W): pure reshape, no transpose / extra HBM traffic.
    g3 = g.reshape(N, F_g, HW)
    x3 = x.reshape(N, F_l, HW)

    itemsize = jnp.dtype(x.dtype).itemsize
    if tile is None:
        tile_eff = _pick_tile(HW, F_g, F_l, F_int, itemsize)
    else:
        tile_eff = _pick_tile(HW, F_g, F_l, F_int, itemsize, max_tile=tile)
    grid = (N, pl.cdiv(HW, tile_eff))

    # VMEM limit: double-buffered streaming blocks for g/x/out (+ headroom),
    # clamped so we never exceed what is safe on v7x's 64 MiB VMEM.
    stream_bytes = 2 * tile_eff * (F_g + 2 * F_l) * itemsize
    vmem_limit = int(min(48 * 1024 * 1024,
                         max(32 * 1024 * 1024, 2 * stream_bytes)))

    out = pl.pallas_call(
        attention_gate_kernel,
        out_shape=jax.ShapeDtypeStruct((N, F_l, HW), x.dtype),
        grid_spec=pltpu.PrefetchScalarGridSpec(
            num_scalar_prefetch=0,
            grid=grid,
            in_specs=[
                pl.BlockSpec((None, F_g, tile_eff), lambda n, j: (n, 0, j)),
                pl.BlockSpec((None, F_l, tile_eff), lambda n, j: (n, 0, j)),
                pl.BlockSpec((F_int, F_g), lambda n, j: (0, 0)),
                pl.BlockSpec((F_int, F_l), lambda n, j: (0, 0)),
                pl.BlockSpec((F_int, 1), lambda n, j: (0, 0)),
                pl.BlockSpec((F_int, 1), lambda n, j: (0, 0)),
                pl.BlockSpec((1, 1), lambda n, j: (0, 0)),
            ],
            out_specs=pl.BlockSpec((None, F_l, tile_eff), lambda n, j: (n, 0, j)),
        ),
        compiler_params=pltpu.CompilerParams(
            dimension_semantics=("parallel", "parallel"),
            vmem_limit_bytes=vmem_limit),
        interpret=interpret,
        # NOTE: input_output_aliases={1: 0} would save the output allocation,
        # but donating x is unsafe if the caller still uses it; left off.
    )(g3, x3, wg_t, wx_t, b_gx, wp_col, bp_s)

    # (N, F_l, HW) -> NCHW: pure reshape.
    return out.reshape(N, F_l, H, W)


def reference_attention_block(g, x, params):
    """Plain-JAX reference of the same (eval-mode-BN) forward pass."""
    N, F_g, H, W = g.shape
    _, F_l, _, _ = x.shape
    g2 = jnp.transpose(g, (0, 2, 3, 1)).reshape(-1, F_g).astype(jnp.float32)
    x2 = jnp.transpose(x, (0, 2, 3, 1)).reshape(-1, F_l).astype(jnp.float32)
    wg, bg = fold_bn(params["wg"], params["bg"], *params["bn_g"])
    wx, bx = fold_bn(params["wx"], params["bx"], *params["bn_x"])
    wp, bp = fold_bn(params["wp"], params["bp"], *params["bn_p"])
    g1 = g2 @ wg + bg
    x1 = x2 @ wx + bx
    a = jnp.maximum(g1 + x1, 0.0)
    psi = jax.nn.sigmoid(a @ wp.reshape(-1, 1) + bp)
    out = x2 * psi
    return jnp.transpose(out.reshape(N, H, W, F_l), (0, 3, 1, 2)).astype(x.dtype)


def make_params(key, F_g, F_l, F_int):
    ks = jax.random.split(key, 12)

    def bn(k, c):
        k1, k2, k3, k4 = jax.random.split(k, 4)
        gamma = 1.0 + 0.1 * jax.random.normal(k1, (c,), jnp.float32)
        beta = 0.1 * jax.random.normal(k2, (c,), jnp.float32)
        mean = 0.1 * jax.random.normal(k3, (c,), jnp.float32)
        var = 1.0 + 0.1 * jnp.abs(jax.random.normal(k4, (c,), jnp.float32))
        return (gamma, beta, mean, var)

    return {
        # conv weights stored as (Cin, Cout) matmul matrices (1x1 convs)
        "wg": 0.1 * jax.random.normal(ks[0], (F_g, F_int), jnp.float32),
        "bg": 0.1 * jax.random.normal(ks[1], (F_int,), jnp.float32),
        "wx": 0.1 * jax.random.normal(ks[2], (F_l, F_int), jnp.float32),
        "bx": 0.1 * jax.random.normal(ks[3], (F_int,), jnp.float32),
        "wp": 0.1 * jax.random.normal(ks[4], (F_int, 1), jnp.float32),
        "bp": 0.1 * jax.random.normal(ks[5], (1,), jnp.float32),
        "bn_g": bn(ks[6], F_int),
        "bn_x": bn(ks[7], F_int),
        "bn_p": bn(ks[8], 1),
    }


def _run_case(key, N, F_g, F_l, F_int, H, W):
    k_g, k_x, k_p = jax.random.split(key, 3)
    g = jax.random.normal(k_g, (N, F_g, H, W), jnp.float32)
    x = jax.random.normal(k_x, (N, F_l, H, W), jnp.float32)
    params = make_params(k_p, F_g, F_l, F_int)

    out = attention_block(g, x, params)
    out = jax.block_until_ready(out)
    ref = reference_attention_block(g, x, params)

    assert out.shape == (N, F_l, H, W)
    # Tolerance accounts for TPU f32-matmul precision and the different (but
    # mathematically equivalent) operand order / psi reduction in the kernel.
    assert jnp.allclose(out, ref, atol=2e-3, rtol=2e-3), (
        float(jnp.max(jnp.abs(out - ref))))


if __name__ == "__main__":
    key = jax.random.PRNGKey(0)
    k1, k2 = jax.random.split(key, 2)

    # Small shapes consistent with the module: batch=2, channels=4, spatial=16.
    _run_case(k1, N=2, F_g=4, F_l=4, F_int=8, H=16, W=16)
    # Second case: different channel counts and HW not a multiple of 128.
    _run_case(k2, N=2, F_g=8, F_l=16, F_int=8, H=8, W=8)

    print("KERNEL_OK")
</pallas_src>

<mosaic_0001>
module attributes {stable_mosaic.version = 11 : i64} {
  func.func @attention_gate_kernel(%arg0: i32, %arg1: i32, %arg2: memref<1x4x256xf32, #tpu.memory_space<vmem>>, %arg3: memref<1x4x256xf32, #tpu.memory_space<vmem>>, %arg4: memref<8x4xf32, #tpu.memory_space<vmem>>, %arg5: memref<8x4xf32, #tpu.memory_space<vmem>>, %arg6: memref<8x1xf32, #tpu.memory_space<vmem>>, %arg7: memref<8x1xf32, #tpu.memory_space<vmem>>, %arg8: memref<1x1xf32, #tpu.memory_space<vmem>>, %arg9: memref<1x4x256xf32, #tpu.memory_space<vmem>>) attributes {dimension_semantics = [#tpu.dimension_semantics<parallel>, #tpu.dimension_semantics<parallel>], iteration_bounds = array<i64: 2, 1>, scalar_prefetch = 0 : i64, scratch_operands = 0 : i64, tpu.core_type = #tpu.core_type<tc>, window_params = [{transform_indices = @transform_0, window_bounds = array<i64: 1, 4, 256>}, {transform_indices = @transform_1, window_bounds = array<i64: 1, 4, 256>}, {pipeline_mode = #tpu.pipeline_mode<synchronous>, transform_indices = @transform_2, window_bounds = array<i64: 8, 4>}, {pipeline_mode = #tpu.pipeline_mode<synchronous>, transform_indices = @transform_3, window_bounds = array<i64: 8, 4>}, {pipeline_mode = #tpu.pipeline_mode<synchronous>, transform_indices = @transform_4, window_bounds = array<i64: 8, 1>}, {pipeline_mode = #tpu.pipeline_mode<synchronous>, transform_indices = @transform_5, window_bounds = array<i64: 8, 1>}, {pipeline_mode = #tpu.pipeline_mode<synchronous>, transform_indices = @transform_6, window_bounds = array<i64: 1, 1>}, {transform_indices = @transform_7, window_bounds = array<i64: 1, 4, 256>}]} {
    %c0 = arith.constant 0 : index
    %c0_0 = arith.constant 0 : index
    %c0_1 = arith.constant 0 : index
    %0 = vector.load %arg2[%c0, %c0_0, %c0_1] : memref<1x4x256xf32, #tpu.memory_space<vmem>>, vector<1x4x256xf32>
    %1 = vector.shape_cast %0 : vector<1x4x256xf32> to vector<4x256xf32>
    %c0_2 = arith.constant 0 : index
    %c0_3 = arith.constant 0 : index
    %c0_4 = arith.constant 0 : index
    %2 = vector.load %arg3[%c0_2, %c0_3, %c0_4] : memref<1x4x256xf32, #tpu.memory_space<vmem>>, vector<1x4x256xf32>
    %3 = vector.shape_cast %2 : vector<1x4x256xf32> to vector<4x256xf32>
    %c0_5 = arith.constant 0 : index
    %c0_6 = arith.constant 0 : index
    %4 = vector.load %arg4[%c0_5, %c0_6] : memref<8x4xf32, #tpu.memory_space<vmem>>, vector<8x4xf32>
    %cst = arith.constant dense<0.000000e+00> : vector<8x256xf32>
    %5 = tpu.matmul %4, %1, %cst {dimension_numbers = #tpu.dot_dimension_numbers<[1], [0], [0], [1], [0, 0, 1, 1], [], []>} : vector<8x4xf32>, vector<4x256xf32>, vector<8x256xf32> -> vector<8x256xf32>
    %c0_7 = arith.constant 0 : index
    %c0_8 = arith.constant 0 : index
    %6 = vector.load %arg5[%c0_7, %c0_8] : memref<8x4xf32, #tpu.memory_space<vmem>>, vector<8x4xf32>
    %cst_9 = arith.constant dense<0.000000e+00> : vector<8x256xf32>
    %7 = tpu.matmul %6, %3, %cst_9 {dimension_numbers = #tpu.dot_dimension_numbers<[1], [0], [0], [1], [0, 0, 1, 1], [], []>} : vector<8x4xf32>, vector<4x256xf32>, vector<8x256xf32> -> vector<8x256xf32>
    %8 = arith.addf %5, %7 : vector<8x256xf32>
    %c0_10 = arith.constant 0 : index
    %c0_11 = arith.constant 0 : index
    %9 = vector.load %arg6[%c0_10, %c0_11] : memref<8x1xf32, #tpu.memory_space<vmem>>, vector<8x1xf32>
    %10 = vector.broadcast %9 : vector<8x1xf32> to vector<8x256xf32>
    %11 = arith.addf %8, %10 : vector<8x256xf32>
    %cst_12 = arith.constant 0.000000e+00 : f32
    %12 = vector.broadcast %cst_12 : f32 to vector<8x256xf32>
    %13 = arith.maximumf %11, %12 : vector<8x256xf32>
    %c0_13 = arith.constant 0 : index
    %c0_14 = arith.constant 0 : index
    %14 = vector.load %arg7[%c0_13, %c0_14] : memref<8x1xf32, #tpu.memory_space<vmem>>, vector<8x1xf32>
    %15 = vector.broadcast %14 : vector<8x1xf32> to vector<8x256xf32>
    %16 = arith.mulf %13, %15 : vector<8x256xf32>
    %cst_15 = arith.constant dense<0.000000e+00> : vector<256xf32>
    %17 = vector.multi_reduction <add>, %16, %cst_15 [0] : vector<8x256xf32> to vector<256xf32>
    %18 = vector.shape_cast %17 : vector<256xf32> to vector<1x256xf32>
    %c0_16 = arith.constant 0 : index
    %c0_17 = arith.constant 0 : index
    %19 = vector.load %arg8[%c0_16, %c0_17] : memref<1x1xf32, #tpu.memory_space<vmem>>, vector<1x1xf32>
    %20 = vector.broadcast %19 : vector<1x1xf32> to vector<1x256xf32>
    %21 = arith.addf %18, %20 : vector<1x256xf32>
    %22 = arith.negf %21 : vector<1x256xf32>
    %23 = math.exp %22 : vector<1x256xf32>
    %cst_18 = arith.constant 1.000000e+00 : f32
    %24 = vector.broadcast %cst_18 : f32 to vector<1x256xf32>
    %25 = arith.addf %24, %23 : vector<1x256xf32>
    %26 = arith.divf %24, %25 : vector<1x256xf32>
    %27 = vector.broadcast %26 : vector<1x256xf32> to vector<4x256xf32>
    %28 = arith.mulf %3, %27 : vector<4x256xf32>
    %c0_19 = arith.constant 0 : index
    %c0_20 = arith.constant 0 : index
    %c0_21 = arith.constant 0 : index
    %29 = vector.load %arg9[%c0_19, %c0_20, %c0_21] : memref<1x4x256xf32, #tpu.memory_space<vmem>>, vector<1x4x256xf32>
    %30 = vector.shape_cast %29 : vector<1x4x256xf32> to vector<4x256xf32>
    %31 = vector.shape_cast %28 : vector<4x256xf32> to vector<1x4x256xf32>
    tpu.vector_store %arg9[%c0_19, %c0_20, %c0_21], %31 {strides = array<i32>} : memref<1x4x256xf32, #tpu.memory_space<vmem>>, vector<1x4x256xf32>,
    return
  }
  func.func @transform_0(%arg0: i32, %arg1: i32) -> (i32, i32, i32) {
    %c0_i32 = arith.constant 0 : i32
    %c0_i32_0 = arith.constant 0 : i32
    return %arg0, %c0_i32, %arg1 : i32, i32, i32
  }
  func.func @transform_1(%arg0: i32, %arg1: i32) -> (i32, i32, i32) {
    %c0_i32 = arith.constant 0 : i32
    %c0_i32_0 = arith.constant 0 : i32
    return %arg0, %c0_i32, %arg1 : i32, i32, i32
  }
  func.func @transform_2(%arg0: i32, %arg1: i32) -> (i32, i32) {
    %c0_i32 = arith.constant 0 : i32
    %c0_i32_0 = arith.constant 0 : i32
    %c0_i32_1 = arith.constant 0 : i32
    return %c0_i32, %c0_i32_0 : i32, i32
  }
  func.func @transform_3(%arg0: i32, %arg1: i32) -> (i32, i32) {
    %c0_i32 = arith.constant 0 : i32
    %c0_i32_0 = arith.constant 0 : i32
    %c0_i32_1 = arith.constant 0 : i32
    return %c0_i32, %c0_i32_0 : i32, i32
  }
  func.func @transform_4(%arg0: i32, %arg1: i32) -> (i32, i32) {
    %c0_i32 = arith.constant 0 : i32
    %c0_i32_0 = arith.constant 0 : i32
    %c0_i32_1 = arith.constant 0 : i32
    return %c0_i32, %c0_i32_0 : i32, i32
  }
  func.func @transform_5(%arg0: i32, %arg1: i32) -> (i32, i32) {
    %c0_i32 = arith.constant 0 : i32
    %c0_i32_0 = arith.constant 0 : i32
    %c0_i32_1 = arith.constant 0 : i32
    return %c0_i32, %c0_i32_0 : i32, i32
  }
  func.func @transform_6(%arg0: i32, %arg1: i32) -> (i32, i32) {
    %c0_i32 = arith.constant 0 : i32
    %c0_i32_0 = arith.constant 0 : i32
    %c0_i32_1 = arith.constant 0 : i32
    return %c0_i32, %c0_i32_0 : i32, i32
  }
  func.func @transform_7(%arg0: i32, %arg1: i32) -> (i32, i32, i32) {
    %c0_i32 = arith.constant 0 : i32
    %c0_i32_0 = arith.constant 0 : i32
    return %arg0, %c0_i32, %arg1 : i32, i32, i32
  }
}

</mosaic_0001>

<llo_original>
// kernel: tpu_custom_call.1
$region0: #{tpu_custom_call.1}
  #allocation0 [shape = 'u32[]', space=smem, size = 0x4, offset = 0x4, fixed_abs, tag = 'smem constant byte address 0x4 - core index']
  #allocation1 [shape = 'u32[144,128]{1,0:T(1,128)}', space=vmem, size = 0x12000, scoped, tag = 'internal scratch']
  #allocation2 [shape = 'f32[1,1]{1,0:T(1,128)S(1)}', space=vmem, size = 0x200, scoped, tag = 'scoped memory for tpu_custom_call.1']
  %s0 = inlined_call_operand.vmem [shape: f32[2,4,256], index: 0, kind: input, shape index: {}]
  %s1 = inlined_call_operand.vmem [shape: f32[2,4,256], index: 1, kind: input, shape index: {}]
  %s2 = inlined_call_operand.vmem [shape: f32[8,4], index: 2, kind: input, shape index: {}]
  %s3 = inlined_call_operand.vmem [shape: f32[8,4], index: 3, kind: input, shape index: {}]
  %s4 = inlined_call_operand.vmem [shape: f32[8,1], index: 4, kind: input, shape index: {}]
  %s5 = inlined_call_operand.vmem [shape: f32[8,1], index: 5, kind: input, shape index: {}]
  %s6 = inlined_call_operand.<no memory space> [shape: f32[1,1], index: 6, kind: input, shape index: {}]
  %s7 = inlined_call_operand.hbm [shape: f32[2,4,256], index: 7, kind: output, shape index: {}]
  %s8 = sld [smem:[#allocation0]]
  $region61: #{tpu_custom_call.1} parent=0
    _
  %s10 = ssub.s32 1, %s8
  %s11 = scalar_select 0, %s10, %s8
  %v12 = vstv %s6
  %13 = vst [vmem:[#allocation2] sm:$0x1] %v12
  $region1: #{tpu_custom_call.1} parent=0
    #allocation3 [shape = 'u8[8192]{0}', space=vmem, size = 0x2000, scoped, tag = 'output window, operand 0']
    #allocation4 [shape = 's32[2]{0}', space=sflag, size = 0x8, scoped, tag = 'scoped memory for tpu_custom_call.1']
    %14 = vsyncpa [#allocation4], 0
    %s15 = scalar_lea.sflag [#allocation4], 1
    %16 = vsyncpa %s15, 0
    loop: start=0, step=1, limit=4
    $region2: #{tpu_custom_call.1} parent=1 // loop_pre_header
      _
    $region3: #{tpu_custom_call.1} parent=1 // loop_header
      %s18 = sphi 0, %s22
      %p19 = scmp.ge.s32.totalorder %s18, 4
      %s25 = sphi 0, %s37
      %s26 = sphi 0, %s33
      %s27 = sphi 0, %s25
      %s28 = sphi 0, %s26
      %s29 = sphi 0, %s27
      %s30 = sphi 0, %s28
      %s42 = sphi 0, %s44
      %s45 = sphi 0, %s42
      %s46 = sphi 0, %s45
      %s62 = sphi 0, %s46
      %s70 = sphi 0, %s72
      %s73 = sphi 0, %s70
      %s74 = sphi 0, %s73
      %s90 = sphi 0, %s74
      %s94 = sphi 0, %s94
      %s96 = sphi 0, %s94
      %s97 = sphi 0, %s96
      %s111 = sphi 0, %s97
      %s115 = sphi 0, %s115
      %s117 = sphi 0, %s115
      %s118 = sphi 0, %s117
      %s132 = sphi 0, %s118
      %s136 = sphi 0, %s136
      %s138 = sphi 0, %s136
      %s139 = sphi 0, %s138
      %s153 = sphi 0, %s139
      %s157 = sphi 0, %s157
      %s159 = sphi 0, %s157
      %s160 = sphi 0, %s159
      %s174 = sphi 0, %s160
      %s178 = sphi 0, %s178
      %s180 = sphi 0, %s178
      %s181 = sphi 0, %s180
      %s195 = sphi 0, %s181
      %s203 = sphi 0, %s205
      %s206 = sphi 0, %s203
      %s207 = sphi 0, %s206
      %s223 = sphi 0, %s207
    $region4: #{tpu_custom_call.1} parent=1 // loop_header_branch
      %21 = sbr.rel (%p19) target = $region8
    $region5: #{tpu_custom_call.1} parent=1 // loop_body
      %s23 = ssub.s32 %s18, 1
      %s24 = ssub.s32 %s18, 2
      %s31 = sadd.s32 1, %s26
      %p32 = scmp.ge.s32.totalorder %s31, 1
      %s33 = scalar_select %p32, 0, %s31
      %s34 = sadd.s32 1, %s25
      %s35 = scalar_select %p32, %s34, %s25
      %p36 = scmp.ge.s32.totalorder %s35, 2
      %s37 = scalar_select %p36, 0, %s35
      %s38 = ssub.s32 %s25, %s37
      %s39 = ssub.s32 %s26, %s33
      %s40 = sor.u32 %s38, %s39
      %p41 = scmp.eq.s32.totalorder %s40, 0
      %s43 = sadd.s32 %s42, 1
      %s44 = scalar_select %p41, %s42, %s43
      %p47 = pneg %p41
      %p48 = scmp.eq.s32.totalorder %s18, 1
      %p49 = por %p47, %p48
      %p50 = scmp.ne.s32.totalorder %s42, %s45
      %p51 = scmp.eq.s32.totalorder %s18, 0
      %p52 = por %p50, %p51
      %p53 = scmp.ne.s32.totalorder %s42, %s45
      %p54 = scmp.eq.s32.totalorder %s23, 1
      %p55 = por %p53, %p54
      %p56 = scmp.ne.s32.totalorder %s45, %s46
      %p57 = scmp.eq.s32.totalorder %s23, 0
      %p58 = por %p56, %p57
      %p59 = scmp.ne.s32.totalorder %s45, %s46
      %p60 = scmp.eq.s32.totalorder %s24, 1
      %p61 = por %p59, %p60
      %p63 = scmp.ne.s32.totalorder %s46, %s62
      %p64 = scmp.eq.s32.totalorder %s24, 0
      %p65 = por %p63, %p64
      %s66 = ssub.s32 %s25, %s37
      %s67 = ssub.s32 %s26, %s33
      %s68 = sor.u32 %s66, %s67
      %p69 = scmp.eq.s32.totalorder %s68, 0
      %s71 = sadd.s32 %s70, 1
      %s72 = scalar_select %p69, %s70, %s71
      %p75 = pneg %p69
      %p76 = scmp.eq.s32.totalorder %s18, 1
      %p77 = por %p75, %p76
      %p78 = scmp.ne.s32.totalorder %s70, %s73
      %p79 = scmp.eq.s32.totalorder %s18, 0
      %p80 = por %p78, %p79
      %p81 = scmp.ne.s32.totalorder %s70, %s73
      %p82 = scmp.eq.s32.totalorder %s23, 1
      %p83 = por %p81, %p82
      %p84 = scmp.ne.s32.totalorder %s73, %s74
      %p85 = scmp.eq.s32.totalorder %s23, 0
      %p86 = por %p84, %p85
      %p87 = scmp.ne.s32.totalorder %s73, %s74
      %p88 = scmp.eq.s32.totalorder %s24, 1
      %p89 = por %p87, %p88
      %p91 = scmp.ne.s32.totalorder %s74, %s90
      %p92 = scmp.eq.s32.totalorder %s24, 0
      %p93 = por %p91, %p92
      %s95 = sadd.s32 %s94, 1
      %p98 = scmp.eq.s32.totalorder %s18, 1
      %p99 = scmp.ne.s32.totalorder %s94, %s96
      %p100 = scmp.eq.s32.totalorder %s18, 0
      %p101 = por %p99, %p100
      %p102 = scmp.ne.s32.totalorder %s94, %s96
      %p103 = scmp.eq.s32.totalorder %s23, 1
      %p104 = por %p102, %p103
      %p105 = scmp.ne.s32.totalorder %s96, %s97
      %p106 = scmp.eq.s32.totalorder %s23, 0
      %p107 = por %p105, %p106
      %p108 = scmp.ne.s32.totalorder %s96, %s97
      %p109 = scmp.eq.s32.totalorder %s24, 1
      %p110 = por %p108, %p109
      %p112 = scmp.ne.s32.totalorder %s97, %s111
      %p113 = scmp.eq.s32.totalorder %s24, 0
      %p114 = por %p112, %p113
      %s116 = sadd.s32 %s115, 1
      %p119 = scmp.eq.s32.totalorder %s18, 1
      %p120 = scmp.ne.s32.totalorder %s115, %s117
      %p121 = scmp.eq.s32.totalorder %s18, 0
      %p122 = por %p120, %p121
      %p123 = scmp.ne.s32.totalorder %s115, %s117
      %p124 = scmp.eq.s32.totalorder %s23, 1
      %p125 = por %p123, %p124
      %p126 = scmp.ne.s32.totalorder %s117, %s118
      %p127 = scmp.eq.s32.totalorder %s23, 0
      %p128 = por %p126, %p127
      %p129 = scmp.ne.s32.totalorder %s117, %s118
      %p130 = scmp.eq.s32.totalorder %s24, 1
      %p131 = por %p129, %p130
      %p133 = scmp.ne.s32.totalorder %s118, %s132
      %p134 = scmp.eq.s32.totalorder %s24, 0
      %p135 = por %p133, %p134
      %s137 = sadd.s32 %s136, 1
      %p140 = scmp.eq.s32.totalorder %s18, 1
      %p141 = scmp.ne.s32.totalorder %s136, %s138
      %p142 = scmp.eq.s32.totalorder %s18, 0
      %p143 = por %p141, %p142
      %p144 = scmp.ne.s32.totalorder %s136, %s138
      %p145 = scmp.eq.s32.totalorder %s23, 1
      %p146 = por %p144, %p145
      %p147 = scmp.ne.s32.totalorder %s138, %s139
      %p148 = scmp.eq.s32.totalorder %s23, 0
      %p149 = por %p147, %p148
      %p150 = scmp.ne.s32.totalorder %s138, %s139
      %p151 = scmp.eq.s32.totalorder %s24, 1
      %p152 = por %p150, %p151
      %p154 = scmp.ne.s32.totalorder %s139, %s153
      %p155 = scmp.eq.s32.totalorder %s24, 0
      %p156 = por %p154, %p155
      %s158 = sadd.s32 %s157, 1
      %p161 = scmp.eq.s32.totalorder %s18, 1
      %p162 = scmp.ne.s32.totalorder %s157, %s159
      %p163 = scmp.eq.s32.totalorder %s18, 0
      %p164 = por %p162, %p163
      %p165 = scmp.ne.s32.totalorder %s157, %s159
      %p166 = scmp.eq.s32.totalorder %s23, 1
      %p167 = por %p165, %p166
      %p168 = scmp.ne.s32.totalorder %s159, %s160
      %p169 = scmp.eq.s32.totalorder %s23, 0
      %p170 = por %p168, %p169
      %p171 = scmp.ne.s32.totalorder %s159, %s160
      %p172 = scmp.eq.s32.totalorder %s24, 1
      %p173 = por %p171, %p172
      %p175 = scmp.ne.s32.totalorder %s160, %s174
      %p176 = scmp.eq.s32.totalorder %s24, 0
      %p177 = por %p175, %p176
      %s179 = sadd.s32 %s178, 1
      %p182 = scmp.eq.s32.totalorder %s18, 1
      %p183 = scmp.ne.s32.totalorder %s178, %s180
      %p184 = scmp.eq.s32.totalorder %s18, 0
      %p185 = por %p183, %p184
      %p186 = scmp.ne.s32.totalorder %s178, %s180
      %p187 = scmp.eq.s32.totalorder %s23, 1
      %p188 = por %p186, %p187
      %p189 = scmp.ne.s32.totalorder %s180, %s181
      %p190 = scmp.eq.s32.totalorder %s23, 0
      %p191 = por %p189, %p190
      %p192 = scmp.ne.s32.totalorder %s180, %s181
      %p193 = scmp.eq.s32.totalorder %s24, 1
      %p194 = por %p192, %p193
      %p196 = scmp.ne.s32.totalorder %s181, %s195
      %p197 = scmp.eq.s32.totalorder %s24, 0
      %p198 = por %p196, %p197
      %s199 = ssub.s32 %s25, %s37
      %s200 = ssub.s32 %s26, %s33
      %s201 = sor.u32 %s199, %s200
      %p202 = scmp.eq.s32.totalorder %s201, 0
      %s204 = sadd.s32 %s203, 1
      %s205 = scalar_select %p202, %s203, %s204
      %p208 = pneg %p202
      %p209 = scmp.eq.s32.totalorder %s18, 1
      %p210 = por %p208, %p209
      %p211 = scmp.ne.s32.totalorder %s203, %s206
      %p212 = scmp.eq.s32.totalorder %s18, 0
      %p213 = por %p211, %p212
      %p214 = scmp.ne.s32.totalorder %s203, %s206
      %p215 = scmp.eq.s32.totalorder %s23, 1
      %p216 = por %p214, %p215
      %p217 = scmp.ne.s32.totalorder %s206, %s207
      %p218 = scmp.eq.s32.totalorder %s23, 0
      %p219 = por %p217, %p218
      %p220 = scmp.ne.s32.totalorder %s206, %s207
      %p221 = scmp.eq.s32.totalorder %s24, 1
      %p222 = por %p220, %p221
      %p224 = scmp.ne.s32.totalorder %s207, %s223
      %p225 = scmp.eq.s32.totalorder %s24, 0
      %p226 = por %p224, %p225
      %p227 = scmp.le.s32.totalorder 1, %s18
      %p228 = scmp.lt.s32.totalorder %s18, 3
      %p229 = pnand %p227, %p228
      %p230 = pneg %p229
      // Predicated region
      $region9: #{tpu_custom_call.1} parent=5 // pred_check
        _
      $region10: #{tpu_custom_call.1} parent=5 // pred_check_branch
        %232 = sbr.rel (%p229) target = $region12
      $region11: #{tpu_custom_call.1} parent=5 // pred_region
        %s233 = ssub.s32 %s18, 1
        // Predicated region
        $region13: #{tpu_custom_call.1} parent=11 // pred_check
          %p234 = pneg %p107
        $region14: #{tpu_custom_call.1} parent=11 // pred_check_branch
          %236 = sbr.rel (%p234) target = $region16
        $region15: #{tpu_custom_call.1} parent=11 // pred_region
          _
        $region16: #{tpu_custom_call.1} parent=11 // pred_fallthru
          _
        // Predicated region
        $region17: #{tpu_custom_call.1} parent=11 // pred_check
          %p237 = pneg %p128
        $region18: #{tpu_custom_call.1} parent=11 // pred_check_branch
          %239 = sbr.rel (%p237) target = $region20
        $region19: #{tpu_custom_call.1} parent=11 // pred_region
          _
        $region20: #{tpu_custom_call.1} parent=11 // pred_fallthru
          _
        // Predicated region
        $region21: #{tpu_custom_call.1} parent=11 // pred_check
          %p240 = pneg %p149
        $region22: #{tpu_custom_call.1} parent=11 // pred_check_branch
          %242 = sbr.rel (%p240) target = $region24
        $region23: #{tpu_custom_call.1} parent=11 // pred_region
          _
        $region24: #{tpu_custom_call.1} parent=11 // pred_fallthru
          _
        // Predicated region
        $region25: #{tpu_custom_call.1} parent=11 // pred_check
          %p243 = pneg %p170
        $region26: #{tpu_custom_call.1} parent=11 // pred_check_branch
          %245 = sbr.rel (%p243) target = $region28
        $region27: #{tpu_custom_call.1} parent=11 // pred_region
          _
        $region28: #{tpu_custom_call.1} parent=11 // pred_fallthru
          _
        // Predicated region
        $region29: #{tpu_custom_call.1} parent=11 // pred_check
          %p246 = pneg %p191
        $region30: #{tpu_custom_call.1} parent=11 // pred_check_branch
          %248 = sbr.rel (%p246) target = $region32
        $region31: #{tpu_custom_call.1} parent=11 // pred_region
          _
        $region32: #{tpu_custom_call.1} parent=11 // pred_fallthru
          _
      $region12: #{tpu_custom_call.1} parent=5 // pred_fallthru
        _
      %p249 = scmp.lt.s32.totalorder %s18, 2
      // Predicated region
      $region33: #{tpu_custom_call.1} parent=5 // pred_check
        %p250 = pneg %p249
      $region34: #{tpu_custom_call.1} parent=5 // pred_check_branch
        %252 = sbr.rel (%p250) target = $region36
      $region35: #{tpu_custom_call.1} parent=5 // pred_region
        // Predicated region
        $region37: #{tpu_custom_call.1} parent=35 // pred_check
          %p253 = pneg %p52
        $region38: #{tpu_custom_call.1} parent=35 // pred_check_branch
          %255 = sbr.rel (%p253) target = $region40
        $region39: #{tpu_custom_call.1} parent=35 // pred_region
          %s256 = smul.u32 2, %s26
          %p257 = scmp.lt.s32.totalorder %s25, 1
          %s258 = scalar_select %p257, %s25, 1
          %p259 = scmp.lt.s32.totalorder %s256, 1
          %s260 = scalar_select %p259, %s256, 1
          %s261 = smul.addr %s258, 2
          %s262 = sadd.s32 %s260, %s261
          %s263 = smul.addr %s262, 4
          %s264 = scalar_lea.vmem %s0, %s263
          %s265 = smul.u32 2, %s26
        $region40: #{tpu_custom_call.1} parent=35 // pred_fallthru
          _
        // Predicated region
        $region41: #{tpu_custom_call.1} parent=35 // pred_check
          %p266 = pneg %p80
        $region42: #{tpu_custom_call.1} parent=35 // pred_check_branch
          %268 = sbr.rel (%p266) target = $region44
        $region43: #{tpu_custom_call.1} parent=35 // pred_region
          %s269 = smul.u32 2, %s26
          %p270 = scmp.lt.s32.totalorder %s25, 1
          %s271 = scalar_select %p270, %s25, 1
          %p272 = scmp.lt.s32.totalorder %s269, 1
          %s273 = scalar_select %p272, %s269, 1
          %s274 = smul.addr %s271, 2
          %s275 = sadd.s32 %s273, %s274
          %s276 = smul.addr %s275, 4
          %s277 = scalar_lea.vmem %s1, %s276
          %s278 = smul.u32 2, %s26
        $region44: #{tpu_custom_call.1} parent=35 // pred_fallthru
          _
      $region36: #{tpu_custom_call.1} parent=5 // pred_fallthru
        _
      %p279 = scmp.le.s32.totalorder 1, %s18
      %p280 = scmp.lt.s32.totalorder %s18, 3
      %p281 = pnand %p279, %p280
      %p282 = pneg %p281
      // Predicated region
      $region45: #{tpu_custom_call.1} parent=5 // pred_check
        _
      $region46: #{tpu_custom_call.1} parent=5 // pred_check_branch
        %284 = sbr.rel (%p281) target = $region48
      $region47: #{tpu_custom_call.1} parent=5 // pred_region
        %s285 = ssub.s32 %s18, 1
        %s286 = smul.u32 2, %s28
        %p287 = scmp.lt.s32.totalorder %s27, 1
        %s288 = scalar_select %p287, %s27, 1
        %p289 = scmp.lt.s32.totalorder %s286, 1
        %s290 = scalar_select %p289, %s286, 1
        %s291 = smul.addr %s288, 2
        %s292 = sadd.s32 %s290, %s291
        %s293 = smul.addr %s292, 4
        %s294 = scalar_lea.vmem %s0, %s293
        %p295 = pneg %p58
        %p296 = pneg %p55
        %s297 = smul.u32 2, %s28
        %p298 = scmp.lt.s32.totalorder %s27, 1
        %s299 = scalar_select %p298, %s27, 1
        %p300 = scmp.lt.s32.totalorder %s297, 1
        %s301 = scalar_select %p300, %s297, 1
        %s302 = smul.addr %s299, 2
        %s303 = sadd.s32 %s301, %s302
        %s304 = smul.addr %s303, 4
        %s305 = scalar_lea.vmem %s1, %s304
        %p306 = pneg %p86
        %p307 = pneg %p83
        %p308 = pneg %p107
        %p309 = pneg %p104
        %p310 = pneg %p128
        %p311 = pneg %p125
        %p312 = pneg %p149
        %p313 = pneg %p146
        %p314 = pneg %p170
        %p315 = pneg %p167
        %p316 = pneg %p191
        %p317 = pneg %p188
        %p318 = pneg %p219
        %p319 = pneg %p216
        %s320 = sand.u32 %s206, 1
        %s321 = scalar_lea.sflag [#allocation4], %s320
        %s322 = sand.u32 %s206, 1
        %s323 = smul.addr %s322, 8
        %s324 = scalar_lea.vmem [#allocation3], %s323
        %s325 = smul.u32 2, %s28
        %p326 = scmp.lt.s32.totalorder %s27, 1
        %s327 = scalar_select %p326, %s27, 1
        %p328 = scmp.lt.s32.totalorder %s325, 1
        %s329 = scalar_select %p328, %s325, 1
        %s330 = smul.addr %s327, 2
        %s331 = sadd.s32 %s329, %s330
        %s332 = smul.addr %s331, 4
        %s333 = scalar_lea.vmem %s0, %s332
        %s334 = smul.u32 2, %s28
        %s335 = smul.u32 2, %s28
        %p336 = scmp.lt.s32.totalorder %s27, 1
        %s337 = scalar_select %p336, %s27, 1
        %p338 = scmp.lt.s32.totalorder %s335, 1
        %s339 = scalar_select %p338, %s335, 1
        %s340 = smul.addr %s337, 2
        %s341 = sadd.s32 %s339, %s340
        %s342 = smul.addr %s341, 4
        %s343 = scalar_lea.vmem %s1, %s342
        %s344 = smul.u32 2, %s28
        %s345 = smul.u32 2, %s28
        %v346 = vld [vmem:[%s333] sm:$0xff]
        %v347 = vld [vmem:[%s343] sm:$0xff]
        %v348 = vld [vmem:[%s2] sm:$0xff]
        %v349 = vld [vmem:[%s3] sm:$0xff]
        %v351 = vcombine.high %v347, %v347
        %vm352 = vcmask 31744
        %v354 = vsel %vm352, %v349, 0
        %vm356 = vcmask 1043456
        %v357 = vsel %vm356, %v347, 0
        %v359 = vsel %vm356, %v351, 0
        %361 = vmatprep.subr.mxu0 %v359
        %362 = vmatpush1.msra.mxu0 %v357
        %363 = vmatprep.subr.mxu0 0.0
        %364 = vmatpush1.msra.mxu0 0.0
        %365 = vmatprep.subr.mxu0 0.0
        %366 = vmatpush1.msra.mxu0 0.0
        %367 = vmatprep.subr.mxu0 0.0
        %368 = vmatpush1.msra.mxu0 0.0
        %369 = vmatprep.subr.mxu0 0.0
        %370 = vmatpush1.msra.mxu0 0.0
        %371 = vmatprep.subr.mxu0 0.0
        %372 = vmatpush1.msra.mxu0 0.0
        %373 = vmatprep.subr.mxu0 0.0
        %374 = vmatpush1.msra.mxu0 0.0
        %375 = vmatprep.subr.mxu0 0.0
        %376 = vmatpush1.msra.mxu0 0.0
        %377 = vmatprep.subr.mxu0 0.0
        %378 = vmatpush1.msra.mxu0 0.0
        %379 = vmatprep.subr.mxu0 0.0
        %380 = vmatpush1.msra.mxu0 0.0
        %381 = vmatprep.subr.mxu0 0.0
        %382 = vmatpush1.msra.mxu0 0.0
        %383 = vmatprep.subr.mxu0 0.0
        %384 = vmatpush1.msra.mxu0 0.0
        %385 = vmatprep.subr.mxu0 0.0
        %386 = vmatpush1.msra.mxu0 0.0
        %387 = vmatprep.subr.mxu0 0.0
        %388 = vmatpush1.msra.mxu0 0.0
        %389 = vmatprep.subr.mxu0 0.0
        %390 = vmatpush1.msra.mxu0 0.0
        %391 = vmatprep.subr.mxu0 0.0
        %392 = vmatpush1.msra.mxu0 0.0
        %393 = vmatprep.subr.mxu0 0.0
        %394 = vmatpush1.msra.mxu0 0.0
        %395 = vmatprep.subr.mxu0 0.0
        %396 = vmatpush1.msra.mxu0 0.0
        %397 = vmatprep.subr.mxu0 0.0
        %398 = vmatpush1.msra.mxu0 0.0
        %399 = vmatprep.subr.mxu0 0.0
        %400 = vmatpush1.msra.mxu0 0.0
        %401 = vmatprep.subr.mxu0 0.0
        %402 = vmatpush1.msra.mxu0 0.0
        %403 = vmatprep.subr.mxu0 0.0
        %404 = vmatpush1.msra.mxu0 0.0
        %405 = vmatprep.subr.mxu0 0.0
        %406 = vmatpush1.msra.mxu0 0.0
        %407 = vmatprep.subr.mxu0 0.0
        %408 = vmatpush1.msra.mxu0 0.0
        %409 = vmatprep.subr.mxu0 0.0
        %410 = vmatpush1.msra.mxu0 0.0
        %411 = vmatprep.subr.mxu0 0.0
        %412 = vmatpush1.msra.mxu0 0.0
        %413 = vmatprep.subr.mxu0 0.0
        %414 = vmatpush1.msra.mxu0 0.0
        %415 = vmatprep.subr.mxu0 0.0
        %416 = vmatpush1.msra.mxu0 0.0
        %417 = vmatprep.subr.mxu0 0.0
        %418 = vmatpush1.msra.mxu0 0.0
        %419 = vmatprep.subr.mxu0 0.0
        %420 = vmatpush1.msra.mxu0 0.0
        %421 = vmatprep.subr.mxu0 0.0
        %422 = vmatpush1.msra.mxu0 0.0
        %423 = vmatprep.subr.mxu0 0.0
        %424 = vmatpush1.msra.mxu0 0.0
        %425 = vmatprep.mubr.f32.mxu0 0.0
        %426 = vmatmul.mubr.f32.gmra.mrb[0].mxu0 %v354
        %v427 = vpop.f32.mrb[0].mxu0
        %v428 = vadd.f32 0.0, %v427
        %v429 = vpop.f32.mrb[0].mxu0
        %v430 = vadd.f32 0.0, %v429
        %431 = vdwg.mxu0
        %v433 = vcombine.high %v346, %v346
        %v435 = vsel %vm352, %v348, 0
        %v437 = vsel %vm356, %v346, 0
        %v439 = vsel %vm356, %v433, 0
        %441 = vmatprep.subr.mxu0 %v439
        %442 = vmatpush1.msra.mxu0 %v437
        %443 = vmatprep.subr.mxu0 0.0
        %444 = vmatpush1.msra.mxu0 0.0
        %445 = vmatprep.subr.mxu0 0.0
        %446 = vmatpush1.msra.mxu0 0.0
        %447 = vmatprep.subr.mxu0 0.0
        %448 = vmatpush1.msra.mxu0 0.0
        %449 = vmatprep.subr.mxu0 0.0
        %450 = vmatpush1.msra.mxu0 0.0
        %451 = vmatprep.subr.mxu0 0.0
        %452 = vmatpush1.msra.mxu0 0.0
        %453 = vmatprep.subr.mxu0 0.0
        %454 = vmatpush1.msra.mxu0 0.0
        %455 = vmatprep.subr.mxu0 0.0
        %456 = vmatpush1.msra.mxu0 0.0
        %457 = vmatprep.subr.mxu0 0.0
        %458 = vmatpush1.msra.mxu0 0.0
        %459 = vmatprep.subr.mxu0 0.0
        %460 = vmatpush1.msra.mxu0 0.0
        %461 = vmatprep.subr.mxu0 0.0
        %462 = vmatpush1.msra.mxu0 0.0
        %463 = vmatprep.subr.mxu0 0.0
        %464 = vmatpush1.msra.mxu0 0.0
        %465 = vmatprep.subr.mxu0 0.0
        %466 = vmatpush1.msra.mxu0 0.0
        %467 = vmatprep.subr.mxu0 0.0
        %468 = vmatpush1.msra.mxu0 0.0
        %469 = vmatprep.subr.mxu0 0.0
        %470 = vmatpush1.msra.mxu0 0.0
        %471 = vmatprep.subr.mxu0 0.0
        %472 = vmatpush1.msra.mxu0 0.0
        %473 = vmatprep.subr.mxu0 0.0
        %474 = vmatpush1.msra.mxu0 0.0
        %475 = vmatprep.subr.mxu0 0.0
        %476 = vmatpush1.msra.mxu0 0.0
        %477 = vmatprep.subr.mxu0 0.0
        %478 = vmatpush1.msra.mxu0 0.0
        %479 = vmatprep.subr.mxu0 0.0
        %480 = vmatpush1.msra.mxu0 0.0
        %481 = vmatprep.subr.mxu0 0.0
        %482 = vmatpush1.msra.mxu0 0.0
        %483 = vmatprep.subr.mxu0 0.0
        %484 = vmatpush1.msra.mxu0 0.0
        %485 = vmatprep.subr.mxu0 0.0
        %486 = vmatpush1.msra.mxu0 0.0
        %487 = vmatprep.subr.mxu0 0.0
        %488 = vmatpush1.msra.mxu0 0.0
        %489 = vmatprep.subr.mxu0 0.0
        %490 = vmatpush1.msra.mxu0 0.0
        %491 = vmatprep.subr.mxu0 0.0
        %492 = vmatpush1.msra.mxu0 0.0
        %493 = vmatprep.subr.mxu0 0.0
        %494 = vmatpush1.msra.mxu0 0.0
        %495 = vmatprep.subr.mxu0 0.0
        %496 = vmatpush1.msra.mxu0 0.0
        %497 = vmatprep.subr.mxu0 0.0
        %498 = vmatpush1.msra.mxu0 0.0
        %499 = vmatprep.subr.mxu0 0.0
        %500 = vmatpush1.msra.mxu0 0.0
        %501 = vmatprep.subr.mxu0 0.0
        %502 = vmatpush1.msra.mxu0 0.0
        %503 = vmatprep.subr.mxu0 0.0
        %504 = vmatpush1.msra.mxu0 0.0
        %505 = vmatprep.mubr.f32.mxu0 0.0
        %506 = vmatmul.mubr.f32.gmra.mrb[0].mxu0 %v435
        %v507 = vpop.f32.mrb[0].mxu0
        %v508 = vadd.f32 %v428, %v507
        %v509 = vpop.f32.mrb[0].mxu0
        %v510 = vadd.f32 %v430, %v509
        %511 = vdwg.mxu0
        %v512 = vld [vmem:[%s4] sm:$0xff]
        %514 = vset.pattern.permute.xlu0 0
        %515 = vperm.xlu0 %514, %v512
        %v516 = vpop.permute.xlu0 %515
        %v518 = vadd.f32 %v508, %v516
        %v519 = vadd.f32 %v510, %v516
        %v520 = vmax.f32 %v518, 0.0
        %v521 = vmax.f32 %v519, 0.0
        %v522 = vld [vmem:[%s5] sm:$0xff]
        %524 = vset.pattern.permute.xlu0 0
        %525 = vperm.xlu0 %524, %v522
        %v526 = vpop.permute.xlu0 %525
        %v528 = vmul.f32 %v520, %v526
        %v529 = vmul.f32 %v521, %v526
        %v530 = vrot.slane %v528, 4
        %v531 = vadd.f32 %v528, %v530
        %v532 = vrot.slane %v531, 2
        %v533 = vadd.f32 %v531, %v532
        %v534 = vrot.slane %v533, 1
        %v535 = vadd.f32 %v533, %v534
        %v536 = vrot.slane %v529, 4
        %v537 = vadd.f32 %v529, %v536
        %v538 = vrot.slane %v537, 2
        %v539 = vadd.f32 %v537, %v538
        %v540 = vrot.slane %v539, 1
        %v541 = vadd.f32 %v539, %v540
        %v542 = vld [vmem:[#allocation2] sm:$0x1]
        %544 = vset.pattern.permute.xlu0 0
        %545 = vperm.xlu0 %544, %v542
        %v546 = vpop.permute.xlu0 %545
        %v548 = vlaneseq
        %v549 = vshrl.u32 %v548, 7
        %v550 = vsub.s32 0, %v549
        %v551 = vrot.slane %v546, %v550
        %v552 = vadd.f32 %v535, %v551
        %v553 = vadd.f32 %v541, %v551
        %v554 = vxor.u32 %v552, 2147483648
        %v555 = vxor.u32 %v553, 2147483648
        %v556 = vmul.f32 %v554, 1.442695
        %v557 = vpow.pop %v556
        %v558 = vmul.f32 %v555, 1.442695
        %v559 = vpow.pop %v558
        %v560 = vadd.f32 %v557, 1.0
        %v561 = vadd.f32 %v559, 1.0
        %v562 = vrcp.pop %v560
        %v563 = vmul.f32 1.0, %v562
        %v564 = vrcp.pop %v561
        %v565 = vmul.f32 1.0, %v564
        %v568 = vcombine.low %v563, %v565
        %v570 = vmul.f32 %v347, %v568
        %571 = vst [vmem:[%s324] sm:$0xff] %v570
        %s572 = sand.u32 %s206, 1
        %s573 = scalar_lea.sflag [#allocation4], %s572
        %s574 = sand.u32 %s206, 1
        %s575 = smul.addr %s574, 8
        %s576 = scalar_lea.vmem [#allocation3], %s575
        // Predicated region
        $region49: #{tpu_custom_call.1} parent=47 // pred_check
          %p577 = pneg %p216
        $region50: #{tpu_custom_call.1} parent=47 // pred_check_branch
          %579 = sbr.rel (%p577) target = $region52
        $region51: #{tpu_custom_call.1} parent=47 // pred_region
          %s580 = smul.u32 2, %s28
          %s582 = ssub.s32 128, 128
          %583 = vsyncadd %s573, %s582
          %s584 = smul.addr %s27, 2
          %s585 = sadd.s32 %s580, %s584
          %s586 = smul.addr %s585, 64
          %s587 = scalar_lea.hbm %s7, %s586
          %s589 = sshll.u32 %s576, 4
          %s590 = int_to_ptr.vmem [resolvable:$true] %s589
          %592 = dma.vmem_to_hbm [thread:$0]  %s590, 128, %s587, %s573
        $region52: #{tpu_custom_call.1} parent=47 // pred_fallthru
          _
      $region48: #{tpu_custom_call.1} parent=5 // pred_fallthru
        _
      %p593 = scmp.le.s32.totalorder 2, %s18
      // Predicated region
      $region53: #{tpu_custom_call.1} parent=5 // pred_check
        %p594 = pneg %p593
      $region54: #{tpu_custom_call.1} parent=5 // pred_check_branch
        %596 = sbr.rel (%p594) target = $region56
      $region55: #{tpu_custom_call.1} parent=5 // pred_region
        %s597 = ssub.s32 %s18, 2
        // Predicated region
        $region57: #{tpu_custom_call.1} parent=55 // pred_check
          %p598 = pneg %p222
        $region58: #{tpu_custom_call.1} parent=55 // pred_check_branch
          %600 = sbr.rel (%p598) target = $region60
        $region59: #{tpu_custom_call.1} parent=55 // pred_region
          %s601 = sand.u32 %s207, 1
          %s602 = scalar_lea.sflag [#allocation4], %s601
          %s603 = sand.u32 %s207, 1
          %s604 = smul.addr %s603, 8
          %s605 = scalar_lea.vmem [#allocation3], %s604
          %606 = dma.done %s602, 128
        $region60: #{tpu_custom_call.1} parent=55 // pred_fallthru
          _
      $region56: #{tpu_custom_call.1} parent=5 // pred_fallthru
        _
    $region6: #{tpu_custom_call.1} parent=1 // loop_footer
      %s22 = sadd.s32 1, %s18
    $region7: #{tpu_custom_call.1} parent=1 // loop_footer_branch
      %17 = sbr.rel target = $region3
    $region8: #{tpu_custom_call.1} parent=1 // loop_exit
      _
    %607 = vsyncpa [#allocation4], 1
    %s608 = scalar_lea.sflag [#allocation4], 1
    %609 = vsyncpa %s608, 1

</llo_original>
